<compile_context>
chip_gen: v6e
topology: v6e:2x2x1
jax: 0.10.0
libtpu: 0.0.40
codegen_flags: <defaults>
</compile_context>

<pallas_src>
import jax
import jax.numpy as jnp
from jax.experimental import pallas as pl
from jax.experimental.pallas import tpu as pltpu


# --------------------------------------------------------------------------- kernel

def _base_compressor_kernel(keys_ref, values_ref, out_keys_ref, out_values_ref):
    # Identity forward: compressed_keys = keys, compressed_values = values.
    out_keys_ref[...] = keys_ref[...]
    out_values_ref[...] = values_ref[...]


# ------------------------------------------------------------------------- tiling

def _round_up(x, m):
    return ((x + m - 1) // m) * m


def _pick_tiles(m_rows, hidden, itemsize, row_align, pipeline_budget_bytes):
    """Pick (tm, th): largest row tile (power-of-two multiple of the sublane packing)
    whose per-step pipeline footprint fits the budget.  Footprint = keys+values,
    input+output tiles, each double-buffered = 8 * tm * th * itemsize bytes."""

    def fits(tm, th):
        return 8 * tm * th * itemsize <= pipeline_budget_bytes

    # Hidden tile: keep the full hidden dim when possible (lane-dense, one DMA per row
    # tile); only fall back to 128-column tiling if even the minimal row tile would
    # overflow the budget (pathologically large hidden).
    th = hidden
    if hidden > 128 and not fits(row_align, hidden):
        th = (pipeline_budget_bytes // (8 * row_align * itemsize)) // 128 * 128
        th = max(128, min(int(th), hidden))

    # Row tile: whole array if it is smaller than one aligned tile, otherwise the
    # largest fitting power-of-two multiple of the sublane packing.
    if m_rows <= row_align:
        return m_rows, th

    tm = row_align
    cand = row_align
    while cand <= min(1024, m_rows):
        if fits(cand, th):
            tm = cand
        cand *= 2
    return tm, th


def _vmem_limit_bytes(tm, th, itemsize):
    needed = 8 * tm * th * itemsize + (4 << 20)  # tiles (double-buffered) + headroom
    try:
        # Cap at 75% of physical VMEM so Mosaic keeps internal scratch headroom
        # (≈48 MiB on v7x's 64 MiB per-TC VMEM, ≈96 MiB on 128 MiB parts).
        cap = int(pltpu.get_tpu_info().vmem_capacity_bytes) * 3 // 4
    except Exception:
        cap = 48 << 20  # safe fallback for the smallest (v7x) generation
    return int(min(cap, max(16 << 20, needed)))


# ------------------------------------------------------------------------ wrapper

def base_compressor_forward(keys, values, importance=None,
                            pipeline_budget_bytes=16 * 1024 * 1024):
    """Pallas equivalent of BaseCompressor.forward: returns (keys, values) unchanged.

    `importance` is accepted but unused, exactly as in the reference forward.
    """
    del importance
    assert keys.shape == values.shape and keys.dtype == values.dtype
    B, S, H = keys.shape
    M = B * S
    dtype = keys.dtype
    itemsize = jnp.dtype(dtype).itemsize

    # Sublane packing: 8 rows/f32, 16 rows/bf16, 32 rows/int8|fp8.
    row_align = 8 * max(1, 4 // itemsize)

    # Metadata-only reshapes (contiguous) — no HBM copies.
    k2 = keys.reshape(M, H)
    v2 = values.reshape(M, H)

    tm, th = _pick_tiles(M, H, itemsize, row_align, pipeline_budget_bytes)
    grid = (pl.cdiv(M, tm), pl.cdiv(H, th))

    row_spec = pl.BlockSpec((tm, th), lambda i, j: (i, j))

    out_k, out_v = pl.pallas_call(
        _base_compressor_kernel,
        out_shape=(jax.ShapeDtypeStruct((M, H), dtype),
                   jax.ShapeDtypeStruct((M, H), dtype)),
        grid_spec=pltpu.PrefetchScalarGridSpec(
            num_scalar_prefetch=0,
            grid=grid,
            in_specs=[row_spec, row_spec],
            out_specs=(row_spec, row_spec),
        ),
        compiler_params=pltpu.CompilerParams(
            dimension_semantics=("parallel", "parallel"),
            vmem_limit_bytes=_vmem_limit_bytes(tm, th, itemsize),
        ),
    )(k2, v2)

    return out_k.reshape(B, S, H), out_v.reshape(B, S, H)


def update_compression_stats(stats, original_size, compressed_size):
    """Pure-Python mirror of BaseCompressor._update_stats (host-side bookkeeping)."""
    return {
        "total_original_size": stats["total_original_size"] + float(original_size),
        "total_compressed_size": stats["total_compressed_size"] + float(compressed_size),
        "compression_count": stats["compression_count"] + 1.0,
    }


def compression_stats(stats, target_compression_ratio=0.5):
    """Mirror of BaseCompressor.get_compression_stats."""
    if stats["total_original_size"] > 0:
        actual = stats["total_compressed_size"] / stats["total_original_size"]
    else:
        actual = 1.0
    return {
        "target_compression_ratio": target_compression_ratio,
        "actual_compression_ratio": actual,
        "memory_reduction": 1.0 - actual,
        "compression_count": stats["compression_count"],
    }


# --------------------------------------------------------------------------- main

if __name__ == "__main__":
    B, S, H = 2, 8, 32  # [batch, seq, hidden]

    key = jax.random.PRNGKey(0)
    k_keys, k_vals = jax.random.split(key)
    keys = jax.random.normal(k_keys, (B, S, H), dtype=jnp.float32)
    values = jax.random.normal(k_vals, (B, S, H), dtype=jnp.float32)

    # f32 path.
    ck, cv = base_compressor_forward(keys, values)
    ck, cv = jax.block_until_ready((ck, cv))
    assert ck.shape == keys.shape and cv.shape == values.shape
    assert bool(jnp.array_equal(ck, keys)), "compressed_keys != keys"
    assert bool(jnp.array_equal(cv, values)), "compressed_values != values"

    # bf16 path (exercises the 16-row sublane-packing branch of the tile picker).
    kb, vb = keys.astype(jnp.bfloat16), values.astype(jnp.bfloat16)
    ckb, cvb = base_compressor_forward(kb, vb)
    ckb, cvb = jax.block_until_ready((ckb, cvb))
    assert bool(jnp.array_equal(ckb, kb)) and bool(jnp.array_equal(cvb, vb))

    # Host-side stats bookkeeping, as in the module's forward.
    stats = {"total_original_size": 0.0, "total_compressed_size": 0.0,
             "compression_count": 0.0}
    stats = update_compression_stats(stats, keys.size, keys.size)
    s = compression_stats(stats)
    assert s["compression_count"] == 1.0 and s["actual_compression_ratio"] == 1.0

    print("KERNEL_OK")
</pallas_src>

<mosaic_0001>
module attributes {stable_mosaic.version = 11 : i64} {
  func.func @_base_compressor_kernel(%arg0: i32, %arg1: i32, %arg2: memref<16x32xf32, #tpu.memory_space<vmem>>, %arg3: memref<16x32xf32, #tpu.memory_space<vmem>>, %arg4: memref<16x32xf32, #tpu.memory_space<vmem>>, %arg5: memref<16x32xf32, #tpu.memory_space<vmem>>) attributes {dimension_semantics = [#tpu.dimension_semantics<parallel>, #tpu.dimension_semantics<parallel>], iteration_bounds = array<i64: 1, 1>, scalar_prefetch = 0 : i64, scratch_operands = 0 : i64, tpu.core_type = #tpu.core_type<tc>, window_params = [{transform_indices = @transform_0, window_bounds = array<i64: 16, 32>}, {transform_indices = @transform_1, window_bounds = array<i64: 16, 32>}, {transform_indices = @transform_2, window_bounds = array<i64: 16, 32>}, {transform_indices = @transform_3, window_bounds = array<i64: 16, 32>}]} {
    %c0 = arith.constant 0 : index
    %c0_0 = arith.constant 0 : index
    %0 = vector.load %arg2[%c0, %c0_0] : memref<16x32xf32, #tpu.memory_space<vmem>>, vector<16x32xf32>
    %c0_1 = arith.constant 0 : index
    %c0_2 = arith.constant 0 : index
    %1 = vector.load %arg4[%c0_1, %c0_2] : memref<16x32xf32, #tpu.memory_space<vmem>>, vector<16x32xf32>
    tpu.vector_store %arg4[%c0_1, %c0_2], %0 {strides = array<i32>} : memref<16x32xf32, #tpu.memory_space<vmem>>, vector<16x32xf32>,
    %c0_3 = arith.constant 0 : index
    %c0_4 = arith.constant 0 : index
    %2 = vector.load %arg3[%c0_3, %c0_4] : memref<16x32xf32, #tpu.memory_space<vmem>>, vector<16x32xf32>
    %c0_5 = arith.constant 0 : index
    %c0_6 = arith.constant 0 : index
    %3 = vector.load %arg5[%c0_5, %c0_6] : memref<16x32xf32, #tpu.memory_space<vmem>>, vector<16x32xf32>
    tpu.vector_store %arg5[%c0_5, %c0_6], %2 {strides = array<i32>} : memref<16x32xf32, #tpu.memory_space<vmem>>, vector<16x32xf32>,
    return
  }
  func.func @transform_0(%arg0: i32, %arg1: i32) -> (i32, i32) {
    %c0_i32 = arith.constant 0 : i32
    return %arg0, %arg1 : i32, i32
  }
  func.func @transform_1(%arg0: i32, %arg1: i32) -> (i32, i32) {
    %c0_i32 = arith.constant 0 : i32
    return %arg0, %arg1 : i32, i32
  }
  func.func @transform_2(%arg0: i32, %arg1: i32) -> (i32, i32) {
    %c0_i32 = arith.constant 0 : i32
    return %arg0, %arg1 : i32, i32
  }
  func.func @transform_3(%arg0: i32, %arg1: i32) -> (i32, i32) {
    %c0_i32 = arith.constant 0 : i32
    return %arg0, %arg1 : i32, i32
  }
}

</mosaic_0001>

<llo_original>
// kernel: tpu_custom_call.1
$region0: #{tpu_custom_call.1}
  #allocation0 [shape = 'u32[]', space=smem, size = 0x4, offset = 0x4, fixed_abs, tag = 'smem constant byte address 0x4 - core index']
  #allocation1 [shape = 'u32[144,128]{1,0:T(1,128)}', space=vmem, size = 0x12000, scoped, tag = 'internal scratch']
  %s0 = inlined_call_operand.hbm [shape: f32[16,32], index: 0, kind: input, shape index: {}]
  %s1 = inlined_call_operand.hbm [shape: f32[16,32], index: 1, kind: input, shape index: {}]
  %s2 = inlined_call_operand.hbm [shape: f32[16,32], index: 2, kind: output, shape index: {0}]
  %s3 = inlined_call_operand.hbm [shape: f32[16,32], index: 3, kind: output, shape index: {1}]
  %4 = xla_tuple %s2, %s3
  %s5 = sld [smem:[#allocation0]]
  $region34: #{tpu_custom_call.1} parent=0
    _
  %s7 = ssub.s32 1, %s5
  %s8 = scalar_select 0, %s7, %s5
  $region1: #{tpu_custom_call.1} parent=0
    #allocation2 [shape = 'u8[8192]{0}', space=vmem, size = 0x2000, scoped, tag = 'input window, operand 0, single buffered']
    #allocation3 [shape = 's32[1]{0}', space=sflag, size = 0x4, scoped, tag = 'scoped memory for tpu_custom_call.1']
    #allocation4 [shape = 's32[1]{0}', space=sflag, size = 0x4, scoped, tag = 'scoped memory for tpu_custom_call.1']
    #allocation5 [shape = 'u8[8192]{0}', space=vmem, size = 0x2000, scoped, tag = 'input window, operand 1, single buffered']
    #allocation6 [shape = 's32[1]{0}', space=sflag, size = 0x4, scoped, tag = 'scoped memory for tpu_custom_call.1']
    #allocation7 [shape = 'u8[8192]{0}', space=vmem, size = 0x2000, scoped, tag = 'output window, operand 0, single buffered']
    #allocation8 [shape = 'u8[8192]{0}', space=vmem, size = 0x2000, scoped, tag = 'output window, operand 1, single buffered']
    #allocation9 [shape = 's32[1]{0}', space=sflag, size = 0x4, scoped, tag = 'scoped memory for tpu_custom_call.1']
    %9 = vsyncpa [#allocation3], 0
    %10 = vsyncpa [#allocation6], 0
    %11 = vsyncpa [#allocation4], 0
    %12 = vsyncpa [#allocation9], 0
    // Predicated region
    $region2: #{tpu_custom_call.1} parent=1 // pred_check
      _
    $region3: #{tpu_custom_call.1} parent=1 // pred_check_branch
      %14 = sbr.rel (0) target = $region5
    $region4: #{tpu_custom_call.1} parent=1 // pred_region
      %s16 = ssub.s32 256, 256
      %17 = vsyncadd [#allocation3], %s16
      %s18 = sshll.u32 [#allocation2], 4
      %s19 = int_to_ptr.vmem [resolvable:$true] %s18
      %24 = dma.hbm_to_vmem [thread:$0]  %s0, 256, %s19, [#allocation3], 128, 128, 8
    $region5: #{tpu_custom_call.1} parent=1 // pred_fallthru
      _
    // Predicated region
    $region6: #{tpu_custom_call.1} parent=1 // pred_check
      _
    $region7: #{tpu_custom_call.1} parent=1 // pred_check_branch
      %26 = sbr.rel (0) target = $region9
    $region8: #{tpu_custom_call.1} parent=1 // pred_region
      %s28 = ssub.s32 256, 256
      %29 = vsyncadd [#allocation6], %s28
      %s30 = sshll.u32 [#allocation5], 4
      %s31 = int_to_ptr.vmem [resolvable:$true] %s30
      %36 = dma.hbm_to_vmem [thread:$0]  %s1, 256, %s31, [#allocation6], 128, 128, 8
    $region9: #{tpu_custom_call.1} parent=1 // pred_fallthru
      _
    // Predicated region
    $region10: #{tpu_custom_call.1} parent=1 // pred_check
      _
    $region11: #{tpu_custom_call.1} parent=1 // pred_check_branch
      %38 = sbr.rel (0) target = $region13
    $region12: #{tpu_custom_call.1} parent=1 // pred_region
      %39 = dma.done [#allocation3], 256
    $region13: #{tpu_custom_call.1} parent=1 // pred_fallthru
      _
    // Predicated region
    $region14: #{tpu_custom_call.1} parent=1 // pred_check
      _
    $region15: #{tpu_custom_call.1} parent=1 // pred_check_branch
      %41 = sbr.rel (0) target = $region17
    $region16: #{tpu_custom_call.1} parent=1 // pred_region
      %42 = dma.done [#allocation6], 256
    $region17: #{tpu_custom_call.1} parent=1 // pred_fallthru
      _
    %v43 = vld [vmem:[#allocation2] sm:$0xff]
    %v44 = vld [vmem:[#allocation2 + $0x8] sm:$0xff]
    %vm45 = vcmask 261120
    %46 = vst.msk [vmem:[#allocation7] sm:$0xff] %vm45, %v43
    %47 = vst.msk [vmem:[#allocation7 + $0x8] sm:$0xff] %vm45, %v44
    %v48 = vld [vmem:[#allocation5] sm:$0xff]
    %v49 = vld [vmem:[#allocation5 + $0x8] sm:$0xff]
    %50 = vst.msk [vmem:[#allocation8] sm:$0xff] %vm45, %v48
    %51 = vst.msk [vmem:[#allocation8 + $0x8] sm:$0xff] %vm45, %v49
    // Predicated region
    $region18: #{tpu_custom_call.1} parent=1 // pred_check
      _
    $region19: #{tpu_custom_call.1} parent=1 // pred_check_branch
      %53 = sbr.rel (0) target = $region21
    $region20: #{tpu_custom_call.1} parent=1 // pred_region
      %s55 = ssub.s32 256, 256
      %56 = vsyncadd [#allocation4], %s55
      %s57 = sshll.u32 [#allocation7], 4
      %s58 = int_to_ptr.vmem [resolvable:$true] %s57
      %63 = dma.vmem_to_hbm [thread:$0]  %s58, 256, %s2, [#allocation4], 128, 128, 8
    $region21: #{tpu_custom_call.1} parent=1 // pred_fallthru
      _
    // Predicated region
    $region22: #{tpu_custom_call.1} parent=1 // pred_check
      _
    $region23: #{tpu_custom_call.1} parent=1 // pred_check_branch
      %65 = sbr.rel (0) target = $region25
    $region24: #{tpu_custom_call.1} parent=1 // pred_region
      %s67 = ssub.s32 256, 256
      %68 = vsyncadd [#allocation9], %s67
      %s69 = sshll.u32 [#allocation8], 4
      %s70 = int_to_ptr.vmem [resolvable:$true] %s69
      %75 = dma.vmem_to_hbm [thread:$0]  %s70, 256, %s3, [#allocation9], 128, 128, 8
    $region25: #{tpu_custom_call.1} parent=1 // pred_fallthru
      _
    // Predicated region
    $region26: #{tpu_custom_call.1} parent=1 // pred_check
      _
    $region27: #{tpu_custom_call.1} parent=1 // pred_check_branch
      %77 = sbr.rel (0) target = $region29
    $region28: #{tpu_custom_call.1} parent=1 // pred_region
      %78 = dma.done [#allocation4], 256
    $region29: #{tpu_custom_call.1} parent=1 // pred_fallthru
      _
    // Predicated region
    $region30: #{tpu_custom_call.1} parent=1 // pred_check
      _
    $region31: #{tpu_custom_call.1} parent=1 // pred_check_branch
      %80 = sbr.rel (0) target = $region33
    $region32: #{tpu_custom_call.1} parent=1 // pred_region
      %81 = dma.done [#allocation9], 256
    $region33: #{tpu_custom_call.1} parent=1 // pred_fallthru
      _
    %82 = vsyncpa [#allocation3], 1
    %83 = vsyncpa [#allocation6], 1
    %84 = vsyncpa [#allocation4], 1
    %85 = vsyncpa [#allocation9], 1

</llo_original>
